<compile_context>
chip_gen: v7x
topology: tpu7x:2x2x1
jax: 0.10.0
libtpu: 0.0.40
codegen_flags: <defaults>
</compile_context>

<pallas_src>
import math

import jax
import jax.numpy as jnp
from jax import lax
from jax.experimental import pallas as pl
from jax.experimental.pallas import tpu as pltpu


def _cdiv(a, b):
    return (a + b - 1) // b


def _round_up(a, b):
    return _cdiv(a, b) * b


def _tpu_vmem_info():
    """(vmem_bytes_per_core, assume_two_tensorcores)."""
    try:
        info = pltpu.get_tpu_info()
        vmem = int(getattr(info, "vmem_capacity_bytes", 64 * 1024 * 1024))
        if vmem <= 0:
            vmem = 64 * 1024 * 1024
    except Exception:
        vmem = 64 * 1024 * 1024  # conservative (v7x-sized) fallback
    # v7x is the 64-MiB-per-TC generation and has 2 TensorCores per chip;
    # v5e / v6e have 128 MiB VMEM and a single TensorCore.
    two_cores = vmem <= 80 * 1024 * 1024
    return vmem, two_cores


def _make_single_step_kernel(inv_m):
    # tile_m == full M: one contiguous DMA per block, no scratch, no RMW.
    def kernel(nbr_ref, out_ref):
        s = jnp.sum(nbr_ref[...], axis=1, dtype=jnp.float32)
        out_ref[...] = (s * inv_m).astype(out_ref.dtype)
    return kernel


def _make_multi_step_kernel(inv_m, m_total, tile_m, ragged_m):
    # P3: f32 accumulator resident across the "arbitrary" M grid axis.
    def kernel(nbr_ref, out_ref, acc_ref):
        j = pl.program_id(1)

        @pl.when(j == 0)
        def _():
            acc_ref[...] = jnp.zeros_like(acc_ref)

        x = nbr_ref[...]
        if ragged_m:
            # Mask out-of-bounds neighbor rows of the last (boundary) M block;
            # their contents are unspecified and must not pollute the sum.
            col = lax.broadcasted_iota(jnp.int32, x.shape, 1)
            x = jnp.where(col < (m_total - j * tile_m), x, jnp.zeros_like(x))
        acc_ref[...] += jnp.sum(x, axis=1, dtype=jnp.float32)

        @pl.when(j == pl.num_programs(1) - 1)
        def _():
            # static reciprocal -> single VPU multiply, no divide
            out_ref[...] = (acc_ref[...] * inv_m).astype(out_ref.dtype)
    return kernel


def aggregator_forward(mailbox_m, *, _target_block_bytes=None):
    """Pallas equivalent of Aggregator.forward: returns {'c': mean(m, axis=1)}."""
    N, M, D = mailbox_m.shape
    dtype = mailbox_m.dtype
    itemsize = jnp.dtype(dtype).itemsize

    if N == 0 or D == 0:
        return {'c': jnp.zeros((N, D), dtype=dtype)}
    if M == 0:
        # mean over an empty neighbor set (matches torch.mean semantics)
        return {'c': jnp.full((N, D), jnp.nan, dtype=dtype)}

    vmem_bytes, two_cores = _tpu_vmem_info()
    small_vmem = vmem_bytes <= 80 * 1024 * 1024
    target = _target_block_bytes
    if target is None:
        target = (8 << 20) if small_vmem else (16 << 20)

    # ---- lane-density fold: (N, M, D) -> (N, M/k, k*D) with k*D % 128 == 0 --
    # (row-major reshape => zero-copy; final k-fold undone on the tiny output)
    fold = 1
    if D < 128:
        k = 128 // math.gcd(D, 128)
        if k > 1 and M % k == 0:
            fold = k
    M_eff = M // fold
    D_eff = D * fold
    x = mailbox_m.reshape(N, M_eff, D_eff) if fold > 1 else mailbox_m
    out_dtype = jnp.float32 if fold > 1 else dtype
    out_itemsize = jnp.dtype(out_dtype).itemsize

    # dtype-aware sublane alignment; lane padding for honest VMEM accounting
    sub_in = max(8, 32 // itemsize)      # 8 f32 / 16 bf16 / 32 int8
    sub_out = max(8, 32 // out_itemsize)
    padded_D = _round_up(D_eff, 128)

    def in_block_bytes(tn, tm):
        return tn * _round_up(tm, sub_in) * padded_D * itemsize

    # ---- tile_m: full M_eff (single reduction step) whenever it fits --------
    if in_block_bytes(sub_out, M_eff) <= target:
        tile_m = M_eff
    else:
        tile_m = (target // (sub_out * padded_D * itemsize)) // sub_in * sub_in
        tile_m = max(sub_in, tile_m)
        tile_m = min(tile_m, _round_up(M_eff, sub_in))
    grid_m = _cdiv(M_eff, tile_m)
    ragged_m = (M_eff % tile_m) != 0 and grid_m > 1

    # ---- tile_n: fill the block budget; balanced even split on 2-TC parts ---
    row_bytes = _round_up(tile_m, sub_in) * padded_D * itemsize
    tn_budget = max(sub_out, (target // max(1, row_bytes)) // sub_out * sub_out)
    n_al = _round_up(N, sub_out)
    steps = max(1, _cdiv(n_al, tn_budget))
    if two_cores:
        if steps == 1 and n_al >= 2 * sub_out:
            steps = 2
        elif steps > 1 and steps % 2 == 1:
            steps += 1
    tile_n = _round_up(_cdiv(n_al, steps), sub_out)
    if tile_n >= N:
        tile_n = N                      # full-dim block is always layout-legal
    grid_n = _cdiv(N, tile_n)           # boundary block handles the N tail

    inv_m = 1.0 / float(M)

    # ---- VMEM budget (double-buffered in/out + scratch + margin) ------------
    in_blk = in_block_bytes(tile_n, tile_m)
    out_blk = _round_up(tile_n, sub_out) * padded_D * out_itemsize
    scratch_blk = _round_up(tile_n, 8) * padded_D * 4 if grid_m > 1 else 0
    needed = 2 * in_blk + 2 * out_blk + scratch_blk + (2 << 20)
    cap = (48 << 20) if small_vmem else (64 << 20)
    vmem_limit = int(min(max(needed, 32 << 20), cap))

    cost = pl.CostEstimate(
        flops=N * M * D + N * D,
        transcendentals=0,
        bytes_accessed=N * M * D * itemsize + N * D_eff * out_itemsize,
    )

    if grid_m == 1:
        out = pl.pallas_call(
            _make_single_step_kernel(inv_m),
            out_shape=jax.ShapeDtypeStruct((N, D_eff), out_dtype),
            grid=(grid_n,),
            in_specs=[pl.BlockSpec((tile_n, M_eff, D_eff), lambda i: (i, 0, 0))],
            out_specs=pl.BlockSpec((tile_n, D_eff), lambda i: (i, 0)),
            compiler_params=pltpu.CompilerParams(
                dimension_semantics=("parallel",),
                vmem_limit_bytes=vmem_limit,
            ),
            cost_estimate=cost,
        )(x)
    else:
        out = pl.pallas_call(
            _make_multi_step_kernel(inv_m, M_eff, tile_m, ragged_m),
            out_shape=jax.ShapeDtypeStruct((N, D_eff), out_dtype),
            grid=(grid_n, grid_m),
            in_specs=[pl.BlockSpec((tile_n, tile_m, D_eff), lambda i, j: (i, j, 0))],
            # output block resident across the M (reduction) axis
            out_specs=pl.BlockSpec((tile_n, D_eff), lambda i, j: (i, 0)),
            scratch_shapes=[pltpu.VMEM((tile_n, D_eff), jnp.float32)],
            compiler_params=pltpu.CompilerParams(
                dimension_semantics=("parallel", "arbitrary"),
                vmem_limit_bytes=vmem_limit,
            ),
            cost_estimate=cost,
        )(x)

    if fold > 1:
        # undo the lane-density fold on the tiny (N, k*D) result (f32 partials)
        c = jnp.sum(out.reshape(N, fold, D), axis=1).astype(dtype)
    else:
        c = out
    return {'c': c}


if __name__ == "__main__":
    key = jax.random.PRNGKey(0)

    # small shapes consistent with the module: 16 nodes, 8 neighbors, hidden 32
    N, M, D = 16, 8, 32
    mailbox_m = jax.random.normal(key, (N, M, D), dtype=jnp.float32)

    out = aggregator_forward(mailbox_m)
    c = jax.block_until_ready(out['c'])
    ref = jnp.mean(mailbox_m, axis=1)
    assert c.shape == (N, D)
    assert jnp.allclose(c, ref, atol=1e-5, rtol=1e-5)

    # ragged-N / no-fold path: boundary blocks handle the tail, no pad copies
    m2 = jax.random.normal(jax.random.PRNGKey(1), (13, 7, 32), dtype=jnp.float32)
    c2 = jax.block_until_ready(aggregator_forward(m2)['c'])
    assert c2.shape == (13, 32)
    assert jnp.allclose(c2, jnp.mean(m2, axis=1), atol=1e-5, rtol=1e-5)

    # forced M-split path: accumulator grid axis + in-kernel masked M tail
    m3 = jax.random.normal(jax.random.PRNGKey(2), (16, 20, 256), dtype=jnp.float32)
    c3 = jax.block_until_ready(
        aggregator_forward(m3, _target_block_bytes=16 * 1024)['c'])
    assert c3.shape == (16, 256)
    assert jnp.allclose(c3, jnp.mean(m3, axis=1), atol=1e-5, rtol=1e-5)

    print("KERNEL_OK")
</pallas_src>

<mosaic_0001>
module attributes {stable_mosaic.version = 11 : i64} {
  func.func @kernel(%arg0: i32, %arg1: memref<8x2x128xf32, #tpu.memory_space<vmem>>, %arg2: memref<8x128xf32, #tpu.memory_space<vmem>>) attributes {dimension_semantics = [#tpu.dimension_semantics<parallel>], iteration_bounds = array<i64: 2>, scalar_prefetch = 0 : i64, scratch_operands = 0 : i64, tpu.core_type = #tpu.core_type<tc>, window_params = [{transform_indices = @transform_0, window_bounds = array<i64: 8, 2, 128>}, {transform_indices = @transform_1, window_bounds = array<i64: 8, 128>}]} {
    %c0 = arith.constant 0 : index
    %c0_0 = arith.constant 0 : index
    %c0_1 = arith.constant 0 : index
    %0 = vector.load %arg1[%c0, %c0_0, %c0_1] : memref<8x2x128xf32, #tpu.memory_space<vmem>>, vector<8x2x128xf32>
    %cst = arith.constant dense<0.000000e+00> : vector<8x128xf32>
    %1 = vector.multi_reduction <add>, %0, %cst [1] : vector<8x2x128xf32> to vector<8x128xf32>
    %cst_2 = arith.constant 1.250000e-01 : f32
    %2 = vector.broadcast %cst_2 : f32 to vector<8x128xf32>
    %3 = arith.mulf %1, %2 : vector<8x128xf32>
    %c0_3 = arith.constant 0 : index
    %c0_4 = arith.constant 0 : index
    %4 = vector.load %arg2[%c0_3, %c0_4] : memref<8x128xf32, #tpu.memory_space<vmem>>, vector<8x128xf32>
    tpu.vector_store %arg2[%c0_3, %c0_4], %3 {strides = array<i32>} : memref<8x128xf32, #tpu.memory_space<vmem>>, vector<8x128xf32>,
    return
  }
  func.func @transform_0(%arg0: i32) -> (i32, i32, i32) {
    %c0_i32 = arith.constant 0 : i32
    %c0_i32_0 = arith.constant 0 : i32
    %c0_i32_1 = arith.constant 0 : i32
    return %arg0, %c0_i32, %c0_i32_0 : i32, i32, i32
  }
  func.func @transform_1(%arg0: i32) -> (i32, i32) {
    %c0_i32 = arith.constant 0 : i32
    %c0_i32_0 = arith.constant 0 : i32
    return %arg0, %c0_i32 : i32, i32
  }
}

</mosaic_0001>

<llo_original>
// kernel: tpu_custom_call.1
$region0: #{tpu_custom_call.1}
  #allocation0 [shape = 'u32[]', space=smem, size = 0x4, offset = 0x4, fixed_abs, tag = 'smem constant byte address 0x4 - core index']
  #allocation1 [shape = 'u32[144,128]{1,0:T(1,128)}', space=vmem, size = 0x12000, scoped, tag = 'internal scratch']
  %s0 = inlined_call_operand.hbm [shape: f32[16,2,128], index: 0, kind: input, shape index: {}]
  %s1 = inlined_call_operand.hbm [shape: f32[16,128], index: 1, kind: output, shape index: {}]
  %s2 = sld [smem:[#allocation0]]
  $region41: #{tpu_custom_call.1} parent=0
    _
  %s4 = ssub.s32 1, %s2
  %s5 = scalar_select 0, %s4, %s2
  $region1: #{tpu_custom_call.1} parent=0
    #allocation2 [shape = 'u8[16384]{0}', space=vmem, size = 0x4000, scoped, tag = 'input window, operand 0']
    #allocation3 [shape = 's32[2]{0}', space=sflag, size = 0x8, scoped, tag = 'scoped memory for tpu_custom_call.1']
    #allocation4 [shape = 's32[2]{0}', space=sflag, size = 0x8, scoped, tag = 'scoped memory for tpu_custom_call.1']
    #allocation5 [shape = 'u8[8192]{0}', space=vmem, size = 0x2000, scoped, tag = 'output window, operand 0']
    %6 = vsyncpa [#allocation3], 0
    %s7 = scalar_lea.sflag [#allocation3], 1
    %8 = vsyncpa %s7, 0
    %9 = vsyncpa [#allocation4], 0
    %s10 = scalar_lea.sflag [#allocation4], 1
    %11 = vsyncpa %s10, 0
    loop: start=0, step=1, limit=4
    $region2: #{tpu_custom_call.1} parent=1 // loop_pre_header
      _
    $region3: #{tpu_custom_call.1} parent=1 // loop_header
      %s13 = sphi 0, %s17
      %p14 = scmp.ge.s32.totalorder %s13, 4
      %s23 = sphi 0, %s25
      %s26 = sphi 0, %s23
      %s27 = sphi 0, %s26
      %s43 = sphi 0, %s27
      %s49 = sphi 0, %s51
      %s52 = sphi 0, %s49
      %s53 = sphi 0, %s52
      %s69 = sphi 0, %s53
    $region4: #{tpu_custom_call.1} parent=1 // loop_header_branch
      %16 = sbr.rel (%p14) target = $region8
    $region5: #{tpu_custom_call.1} parent=1 // loop_body
      %s18 = ssub.s32 %s13, 1
      %s19 = ssub.s32 %s13, 2
      %s20 = sadd.s32 %s13, 1
      %s21 = ssub.s32 %s13, %s20
      %p22 = scmp.eq.s32.totalorder %s21, 0
      %s24 = sadd.s32 %s23, 1
      %s25 = scalar_select %p22, %s23, %s24
      %p28 = pneg %p22
      %p29 = scmp.eq.s32.totalorder %s13, 1
      %p30 = por %p28, %p29
      %p31 = scmp.ne.s32.totalorder %s23, %s26
      %p32 = scmp.eq.s32.totalorder %s13, 0
      %p33 = por %p31, %p32
      %p34 = scmp.ne.s32.totalorder %s23, %s26
      %p35 = scmp.eq.s32.totalorder %s18, 1
      %p36 = por %p34, %p35
      %p37 = scmp.ne.s32.totalorder %s26, %s27
      %p38 = scmp.eq.s32.totalorder %s18, 0
      %p39 = por %p37, %p38
      %p40 = scmp.ne.s32.totalorder %s26, %s27
      %p41 = scmp.eq.s32.totalorder %s19, 1
      %p42 = por %p40, %p41
      %p44 = scmp.ne.s32.totalorder %s27, %s43
      %p45 = scmp.eq.s32.totalorder %s19, 0
      %p46 = por %p44, %p45
      %s47 = ssub.s32 %s13, %s20
      %p48 = scmp.eq.s32.totalorder %s47, 0
      %s50 = sadd.s32 %s49, 1
      %s51 = scalar_select %p48, %s49, %s50
      %p54 = pneg %p48
      %p55 = scmp.eq.s32.totalorder %s13, 1
      %p56 = por %p54, %p55
      %p57 = scmp.ne.s32.totalorder %s49, %s52
      %p58 = scmp.eq.s32.totalorder %s13, 0
      %p59 = por %p57, %p58
      %p60 = scmp.ne.s32.totalorder %s49, %s52
      %p61 = scmp.eq.s32.totalorder %s18, 1
      %p62 = por %p60, %p61
      %p63 = scmp.ne.s32.totalorder %s52, %s53
      %p64 = scmp.eq.s32.totalorder %s18, 0
      %p65 = por %p63, %p64
      %p66 = scmp.ne.s32.totalorder %s52, %s53
      %p67 = scmp.eq.s32.totalorder %s19, 1
      %p68 = por %p66, %p67
      %p70 = scmp.ne.s32.totalorder %s53, %s69
      %p71 = scmp.eq.s32.totalorder %s19, 0
      %p72 = por %p70, %p71
      %p73 = scmp.le.s32.totalorder 1, %s13
      %p74 = scmp.lt.s32.totalorder %s13, 3
      %p75 = pnand %p73, %p74
      %p76 = pneg %p75
      // Predicated region
      $region9: #{tpu_custom_call.1} parent=5 // pred_check
        _
      $region10: #{tpu_custom_call.1} parent=5 // pred_check_branch
        %78 = sbr.rel (%p75) target = $region12
      $region11: #{tpu_custom_call.1} parent=5 // pred_region
        %s79 = ssub.s32 %s13, 1
      $region12: #{tpu_custom_call.1} parent=5 // pred_fallthru
        _
      %p80 = scmp.lt.s32.totalorder %s13, 2
      // Predicated region
      $region13: #{tpu_custom_call.1} parent=5 // pred_check
        %p81 = pneg %p80
      $region14: #{tpu_custom_call.1} parent=5 // pred_check_branch
        %83 = sbr.rel (%p81) target = $region16
      $region15: #{tpu_custom_call.1} parent=5 // pred_region
        // Predicated region
        $region17: #{tpu_custom_call.1} parent=15 // pred_check
          %p84 = pneg %p33
        $region18: #{tpu_custom_call.1} parent=15 // pred_check_branch
          %86 = sbr.rel (%p84) target = $region20
        $region19: #{tpu_custom_call.1} parent=15 // pred_region
          %s87 = sand.u32 %s23, 1
          %s88 = scalar_lea.sflag [#allocation3], %s87
          %s89 = sand.u32 %s23, 1
          %s90 = smul.addr %s89, 16
          %s91 = scalar_lea.vmem [#allocation2], %s90
          %s92 = smul.u32 8, %s13
          %s94 = ssub.s32 256, 256
          %95 = vsyncadd %s88, %s94
          %s96 = smul.addr %s92, 32
          %s97 = scalar_lea.hbm %s0, %s96
          %s98 = sshll.u32 %s91, 4
          %s99 = int_to_ptr.vmem [resolvable:$true] %s98
          %104 = dma.hbm_to_vmem [thread:$0]  %s97, 256, %s99, %s88, 32, 32, 2
        $region20: #{tpu_custom_call.1} parent=15 // pred_fallthru
          _
      $region16: #{tpu_custom_call.1} parent=5 // pred_fallthru
        _
      %p105 = scmp.le.s32.totalorder 1, %s13
      %p106 = scmp.lt.s32.totalorder %s13, 3
      %p107 = pnand %p105, %p106
      %p108 = pneg %p107
      // Predicated region
      $region21: #{tpu_custom_call.1} parent=5 // pred_check
        _
      $region22: #{tpu_custom_call.1} parent=5 // pred_check_branch
        %110 = sbr.rel (%p107) target = $region24
      $region23: #{tpu_custom_call.1} parent=5 // pred_region
        %s111 = ssub.s32 %s13, 1
        %s112 = sand.u32 %s26, 1
        %s113 = scalar_lea.sflag [#allocation3], %s112
        %s114 = sand.u32 %s26, 1
        %s115 = smul.addr %s114, 16
        %s116 = scalar_lea.vmem [#allocation2], %s115
        // Predicated region
        $region25: #{tpu_custom_call.1} parent=23 // pred_check
          %p117 = pneg %p39
        $region26: #{tpu_custom_call.1} parent=23 // pred_check_branch
          %119 = sbr.rel (%p117) target = $region28
        $region27: #{tpu_custom_call.1} parent=23 // pred_region
          %120 = dma.done %s113, 256
        $region28: #{tpu_custom_call.1} parent=23 // pred_fallthru
          _
        %s121 = sand.u32 %s26, 1
        %s122 = scalar_lea.sflag [#allocation3], %s121
        %s123 = sand.u32 %s26, 1
        %s124 = smul.addr %s123, 16
        %s125 = scalar_lea.vmem [#allocation2], %s124
        %p126 = pneg %p39
        %p127 = pneg %p36
        %p128 = pneg %p65
        %p129 = pneg %p62
        %s130 = sand.u32 %s52, 1
        %s131 = scalar_lea.sflag [#allocation4], %s130
        %s132 = sand.u32 %s52, 1
        %s133 = smul.addr %s132, 8
        %s134 = scalar_lea.vmem [#allocation5], %s133
        %s135 = smul.u32 8, %s18
        %v136 = vld [vmem:[%s116] sm:$0x3]
        %v137 = vld [vmem:[%s116 + $0x2] sm:$0x3]
        %v138 = vld [vmem:[%s116 + $0x4] sm:$0x3]
        %v139 = vld [vmem:[%s116 + $0x6] sm:$0x3]
        %v140 = vld [vmem:[%s116 + $0x8] sm:$0x3]
        %v141 = vld [vmem:[%s116 + $0xa] sm:$0x3]
        %v142 = vld [vmem:[%s116 + $0xc] sm:$0x3]
        %v143 = vld [vmem:[%s116 + $0xe] sm:$0x3]
        %vm144 = vcmask 1041408
        %v145 = vsel %vm144, %v136, 0.0
        %v146 = vrot.slane %v145, 4
        %v147 = vadd.f32 %v145, %v146
        %v148 = vrot.slane %v147, 2
        %v149 = vadd.f32 %v147, %v148
        %v150 = vrot.slane %v149, 1
        %v151 = vadd.f32 %v149, %v150
        %v152 = vsel %vm144, %v137, 0.0
        %v153 = vrot.slane %v152, 4
        %v154 = vadd.f32 %v152, %v153
        %v155 = vrot.slane %v154, 2
        %v156 = vadd.f32 %v154, %v155
        %v157 = vrot.slane %v156, 1
        %v158 = vadd.f32 %v156, %v157
        %v159 = vsel %vm144, %v138, 0.0
        %v160 = vrot.slane %v159, 4
        %v161 = vadd.f32 %v159, %v160
        %v162 = vrot.slane %v161, 2
        %v163 = vadd.f32 %v161, %v162
        %v164 = vrot.slane %v163, 1
        %v165 = vadd.f32 %v163, %v164
        %v166 = vsel %vm144, %v139, 0.0
        %v167 = vrot.slane %v166, 4
        %v168 = vadd.f32 %v166, %v167
        %v169 = vrot.slane %v168, 2
        %v170 = vadd.f32 %v168, %v169
        %v171 = vrot.slane %v170, 1
        %v172 = vadd.f32 %v170, %v171
        %v173 = vsel %vm144, %v140, 0.0
        %v174 = vrot.slane %v173, 4
        %v175 = vadd.f32 %v173, %v174
        %v176 = vrot.slane %v175, 2
        %v177 = vadd.f32 %v175, %v176
        %v178 = vrot.slane %v177, 1
        %v179 = vadd.f32 %v177, %v178
        %v180 = vsel %vm144, %v141, 0.0
        %v181 = vrot.slane %v180, 4
        %v182 = vadd.f32 %v180, %v181
        %v183 = vrot.slane %v182, 2
        %v184 = vadd.f32 %v182, %v183
        %v185 = vrot.slane %v184, 1
        %v186 = vadd.f32 %v184, %v185
        %v187 = vsel %vm144, %v142, 0.0
        %v188 = vrot.slane %v187, 4
        %v189 = vadd.f32 %v187, %v188
        %v190 = vrot.slane %v189, 2
        %v191 = vadd.f32 %v189, %v190
        %v192 = vrot.slane %v191, 1
        %v193 = vadd.f32 %v191, %v192
        %v194 = vsel %vm144, %v143, 0.0
        %v195 = vrot.slane %v194, 4
        %v196 = vadd.f32 %v194, %v195
        %v197 = vrot.slane %v196, 2
        %v198 = vadd.f32 %v196, %v197
        %v199 = vrot.slane %v198, 1
        %v200 = vadd.f32 %v198, %v199
        %v201 = vmul.f32 %v151, 0.125
        %v202 = vmul.f32 %v158, 0.125
        %v203 = vmul.f32 %v165, 0.125
        %v204 = vmul.f32 %v172, 0.125
        %v205 = vmul.f32 %v179, 0.125
        %v206 = vmul.f32 %v186, 0.125
        %v207 = vmul.f32 %v193, 0.125
        %v208 = vmul.f32 %v200, 0.125
        %vm217 = vcmask 1041409
        %v218 = vsel %vm217, %v202, %v201
        %vm219 = vcmask 1042434
        %v220 = vsel %vm219, %v203, %v218
        %vm221 = vcmask 1043459
        %v222 = vsel %vm221, %v204, %v220
        %vm223 = vcmask 1044484
        %v224 = vsel %vm223, %v205, %v222
        %vm225 = vcmask 1045509
        %v226 = vsel %vm225, %v206, %v224
        %vm227 = vcmask 1046534
        %v228 = vsel %vm227, %v207, %v226
        %vm229 = vcmask 1047559
        %v230 = vsel %vm229, %v208, %v228
        %232 = vst [vmem:[%s134] sm:$0xff] %v230
        %s233 = sand.u32 %s52, 1
        %s234 = scalar_lea.sflag [#allocation4], %s233
        %s235 = sand.u32 %s52, 1
        %s236 = smul.addr %s235, 8
        %s237 = scalar_lea.vmem [#allocation5], %s236
        // Predicated region
        $region29: #{tpu_custom_call.1} parent=23 // pred_check
          %p238 = pneg %p62
        $region30: #{tpu_custom_call.1} parent=23 // pred_check_branch
          %240 = sbr.rel (%p238) target = $region32
        $region31: #{tpu_custom_call.1} parent=23 // pred_region
          %s242 = ssub.s32 128, 128
          %243 = vsyncadd %s234, %s242
          %s244 = smul.addr %s18, 128
          %s245 = scalar_lea.hbm %s1, %s244
          %s247 = sshll.u32 %s237, 4
          %s248 = int_to_ptr.vmem [resolvable:$true] %s247
          %250 = dma.vmem_to_hbm [thread:$0]  %s248, 128, %s245, %s234
        $region32: #{tpu_custom_call.1} parent=23 // pred_fallthru
          _
      $region24: #{tpu_custom_call.1} parent=5 // pred_fallthru
        _
      %p251 = scmp.le.s32.totalorder 2, %s13
      // Predicated region
      $region33: #{tpu_custom_call.1} parent=5 // pred_check
        %p252 = pneg %p251
      $region34: #{tpu_custom_call.1} parent=5 // pred_check_branch
        %254 = sbr.rel (%p252) target = $region36
      $region35: #{tpu_custom_call.1} parent=5 // pred_region
        %s255 = ssub.s32 %s13, 2
        // Predicated region
        $region37: #{tpu_custom_call.1} parent=35 // pred_check
          %p256 = pneg %p68
        $region38: #{tpu_custom_call.1} parent=35 // pred_check_branch
          %258 = sbr.rel (%p256) target = $region40
        $region39: #{tpu_custom_call.1} parent=35 // pred_region
          %s259 = sand.u32 %s53, 1
          %s260 = scalar_lea.sflag [#allocation4], %s259
          %s261 = sand.u32 %s53, 1
          %s262 = smul.addr %s261, 8
          %s263 = scalar_lea.vmem [#allocation5], %s262
          %264 = dma.done %s260, 128
        $region40: #{tpu_custom_call.1} parent=35 // pred_fallthru
          _
      $region36: #{tpu_custom_call.1} parent=5 // pred_fallthru
        _
    $region6: #{tpu_custom_call.1} parent=1 // loop_footer
      %s17 = sadd.s32 1, %s13
    $region7: #{tpu_custom_call.1} parent=1 // loop_footer_branch
      %12 = sbr.rel target = $region3
    $region8: #{tpu_custom_call.1} parent=1 // loop_exit
      _
    %265 = vsyncpa [#allocation3], 1
    %s266 = scalar_lea.sflag [#allocation3], 1
    %267 = vsyncpa %s266, 1
    %268 = vsyncpa [#allocation4], 1
    %s269 = scalar_lea.sflag [#allocation4], 1
    %270 = vsyncpa %s269, 1

</llo_original>
